<compile_context>
chip_gen: v7x
topology: tpu7x:2x2x1
jax: 0.10.0
libtpu: 0.0.40
codegen_flags: <defaults>
</compile_context>

<pallas_src>
import jax
import jax.numpy as jnp
from jax.experimental import pallas as pl
from jax.experimental.pallas import tpu as pltpu


def _rsi_kernel(x_ref, w_ref, b_ref, o_ref):
    # x_ref: (1, C_in, TILE)         pixels on the lane axis
    # w_ref: (depth*C_out, C_in)     fused 1x1-conv weights (VMEM resident)
    # b_ref: (depth*C_out, 1)        fused biases (VMEM resident)
    # o_ref: (1, depth*C_out, TILE)  lane-dense output slab
    x = x_ref[0]          # (C_in, TILE)
    w = w_ref[...]        # (DC, C_in)
    b = b_ref[...]        # (DC, 1)
    c_in = x.shape[0]
    # C_in is tiny: unrolled VPU multiply-adds (outer-product style), no MXU.
    acc = w[:, 0:1] * x[0:1, :]
    for c in range(1, c_in):
        acc = acc + w[:, c:c + 1] * x[c:c + 1, :]
    acc = acc + b
    o_ref[0] = jnp.maximum(acc, 0.0).astype(o_ref.dtype)


def _pick_tile(hw, max_tile=8192):
    """Largest legal pixel tile: full extent if small, else a big 128-multiple
    that divides H*W."""
    if hw <= max_tile:
        return hw  # full-extent block is always a legal BlockSpec dim
    best = None
    t = 128
    while t <= max_tile:
        if hw % t == 0:
            best = t
        t += 128
    # TODO(synk): pad the pixel axis when H*W has no multiple-of-128 divisor.
    return best if best is not None else hw


def recurrent_init_forward(x, weights, biases):
    """Pallas implementation of RecurrentInit.forward.

    Args:
      x: (B, C_in, H, W) float32, NCHW like PyTorch.
      weights: (depth, C_out, C_in) float32 (PyTorch conv1x1 weights with the
               trailing 1x1 spatial dims squeezed).
      biases: (depth, C_out) float32.
    Returns:
      (B, C_out, H, W, depth) float32, identical semantics to the PyTorch module.
    """
    B, C_in, H, W = x.shape
    depth, C_out, _ = weights.shape
    HW = H * W
    DC = depth * C_out
    tile = _pick_tile(HW)
    assert HW % tile == 0, "pixel tile must divide H*W"

    # Free reshapes only (NCHW is already channel-major over pixels).
    x3 = x.reshape(B, C_in, HW)
    w_fused = weights.reshape(DC, C_in)   # row dc = d*C_out + o
    b_fused = biases.reshape(DC, 1)

    out = pl.pallas_call(
        _rsi_kernel,
        out_shape=jax.ShapeDtypeStruct((B, DC, HW), jnp.float32),
        grid_spec=pltpu.PrefetchScalarGridSpec(
            num_scalar_prefetch=0,
            grid=(B, HW // tile),
            in_specs=[
                pl.BlockSpec((1, C_in, tile), lambda b, i: (b, 0, i)),
                pl.BlockSpec((DC, C_in), lambda b, i: (0, 0)),   # resident
                pl.BlockSpec((DC, 1), lambda b, i: (0, 0)),      # resident
            ],
            out_specs=pl.BlockSpec((1, DC, tile), lambda b, i: (b, 0, i)),
        ),
        compiler_params=pltpu.CompilerParams(
            dimension_semantics=("parallel", "parallel")
        ),
    )(x3, w_fused, b_fused)

    # Plain-JAX glue back to the PyTorch layout (B, C_out, H, W, depth).
    # If the consumer can accept the fused (B, depth*C_out, H*W) layout, this
    # (lane-sparse, depth-last) transpose can be dropped entirely.
    out = out.reshape(B, depth, C_out, H, W)
    return jnp.transpose(out, (0, 2, 3, 4, 1))


def _reference_forward(x, weights, biases):
    # Pure-JAX reference reproducing the PyTorch semantics exactly.
    outs = []
    depth = weights.shape[0]
    for d in range(depth):
        y = jnp.einsum("bchw,oc->bohw", x, weights[d]) + biases[d][None, :, None, None]
        outs.append(jax.nn.relu(y))
    return jnp.stack(outs, axis=-1)


if __name__ == "__main__":
    # Small shapes consistent with the module's forward.
    B, C_in, C_out, H, W, depth = 2, 4, 8, 16, 16, 4

    key = jax.random.PRNGKey(0)
    k_x, k_w, k_b = jax.random.split(key, 3)

    x = jax.random.normal(k_x, (B, C_in, H, W), dtype=jnp.float32)
    # Conv2d(kernel=1) style init; weights stored as (depth, C_out, C_in).
    fan_in = C_in
    bound = 1.0 / (fan_in ** 0.5)
    weights = jax.random.uniform(
        k_w, (depth, C_out, C_in), dtype=jnp.float32, minval=-bound, maxval=bound
    )
    biases = jax.random.uniform(
        k_b, (depth, C_out), dtype=jnp.float32, minval=-bound, maxval=bound
    )

    fwd = jax.jit(recurrent_init_forward)
    out = jax.block_until_ready(fwd(x, weights, biases))

    ref = _reference_forward(x, weights, biases)
    assert out.shape == (B, C_out, H, W, depth), out.shape
    assert jnp.allclose(out, ref, atol=1e-5, rtol=1e-5), "mismatch vs reference"

    print("KERNEL_OK")
</pallas_src>

<mosaic_0001>
module attributes {stable_mosaic.version = 11 : i64} {
  func.func @_rsi_kernel(%arg0: i32, %arg1: i32, %arg2: memref<1x4x256xf32, #tpu.memory_space<vmem>>, %arg3: memref<32x4xf32, #tpu.memory_space<vmem>>, %arg4: memref<32x1xf32, #tpu.memory_space<vmem>>, %arg5: memref<1x32x256xf32, #tpu.memory_space<vmem>>) attributes {dimension_semantics = [#tpu.dimension_semantics<parallel>, #tpu.dimension_semantics<parallel>], iteration_bounds = array<i64: 2, 1>, scalar_prefetch = 0 : i64, scratch_operands = 0 : i64, tpu.core_type = #tpu.core_type<tc>, window_params = [{transform_indices = @transform_0, window_bounds = array<i64: 1, 4, 256>}, {pipeline_mode = #tpu.pipeline_mode<synchronous>, transform_indices = @transform_1, window_bounds = array<i64: 32, 4>}, {pipeline_mode = #tpu.pipeline_mode<synchronous>, transform_indices = @transform_2, window_bounds = array<i64: 32, 1>}, {transform_indices = @transform_3, window_bounds = array<i64: 1, 32, 256>}]} {
    %c0 = arith.constant 0 : index
    %c0_0 = arith.constant 0 : index
    %c0_1 = arith.constant 0 : index
    %0 = vector.load %arg2[%c0, %c0_0, %c0_1] : memref<1x4x256xf32, #tpu.memory_space<vmem>>, vector<1x4x256xf32>
    %1 = vector.shape_cast %0 : vector<1x4x256xf32> to vector<4x256xf32>
    %c0_2 = arith.constant 0 : index
    %c0_3 = arith.constant 0 : index
    %2 = vector.load %arg3[%c0_2, %c0_3] : memref<32x4xf32, #tpu.memory_space<vmem>>, vector<32x4xf32>
    %c0_4 = arith.constant 0 : index
    %c0_5 = arith.constant 0 : index
    %3 = vector.load %arg4[%c0_4, %c0_5] : memref<32x1xf32, #tpu.memory_space<vmem>>, vector<32x1xf32>
    %4 = vector.extract_strided_slice %2 {offsets = [0, 0], sizes = [32, 1], strides = [1, 1]} : vector<32x4xf32> to vector<32x1xf32>
    %5 = vector.extract_strided_slice %1 {offsets = [0, 0], sizes = [1, 256], strides = [1, 1]} : vector<4x256xf32> to vector<1x256xf32>
    %6 = vector.broadcast %4 : vector<32x1xf32> to vector<32x256xf32>
    %7 = vector.broadcast %5 : vector<1x256xf32> to vector<32x256xf32>
    %8 = arith.mulf %6, %7 : vector<32x256xf32>
    %9 = vector.extract_strided_slice %2 {offsets = [0, 1], sizes = [32, 1], strides = [1, 1]} : vector<32x4xf32> to vector<32x1xf32>
    %10 = vector.extract_strided_slice %1 {offsets = [1, 0], sizes = [1, 256], strides = [1, 1]} : vector<4x256xf32> to vector<1x256xf32>
    %11 = vector.broadcast %9 : vector<32x1xf32> to vector<32x256xf32>
    %12 = vector.broadcast %10 : vector<1x256xf32> to vector<32x256xf32>
    %13 = arith.mulf %11, %12 : vector<32x256xf32>
    %14 = arith.addf %8, %13 : vector<32x256xf32>
    %15 = vector.extract_strided_slice %2 {offsets = [0, 2], sizes = [32, 1], strides = [1, 1]} : vector<32x4xf32> to vector<32x1xf32>
    %16 = vector.extract_strided_slice %1 {offsets = [2, 0], sizes = [1, 256], strides = [1, 1]} : vector<4x256xf32> to vector<1x256xf32>
    %17 = vector.broadcast %15 : vector<32x1xf32> to vector<32x256xf32>
    %18 = vector.broadcast %16 : vector<1x256xf32> to vector<32x256xf32>
    %19 = arith.mulf %17, %18 : vector<32x256xf32>
    %20 = arith.addf %14, %19 : vector<32x256xf32>
    %21 = vector.extract_strided_slice %2 {offsets = [0, 3], sizes = [32, 1], strides = [1, 1]} : vector<32x4xf32> to vector<32x1xf32>
    %22 = vector.extract_strided_slice %1 {offsets = [3, 0], sizes = [1, 256], strides = [1, 1]} : vector<4x256xf32> to vector<1x256xf32>
    %23 = vector.broadcast %21 : vector<32x1xf32> to vector<32x256xf32>
    %24 = vector.broadcast %22 : vector<1x256xf32> to vector<32x256xf32>
    %25 = arith.mulf %23, %24 : vector<32x256xf32>
    %26 = arith.addf %20, %25 : vector<32x256xf32>
    %27 = vector.broadcast %3 : vector<32x1xf32> to vector<32x256xf32>
    %28 = arith.addf %26, %27 : vector<32x256xf32>
    %cst = arith.constant 0.000000e+00 : f32
    %29 = vector.broadcast %cst : f32 to vector<32x256xf32>
    %30 = arith.maximumf %28, %29 : vector<32x256xf32>
    %c0_6 = arith.constant 0 : index
    %c0_7 = arith.constant 0 : index
    %c0_8 = arith.constant 0 : index
    %31 = vector.load %arg5[%c0_6, %c0_7, %c0_8] : memref<1x32x256xf32, #tpu.memory_space<vmem>>, vector<1x32x256xf32>
    %32 = vector.shape_cast %31 : vector<1x32x256xf32> to vector<32x256xf32>
    %33 = vector.shape_cast %30 : vector<32x256xf32> to vector<1x32x256xf32>
    tpu.vector_store %arg5[%c0_6, %c0_7, %c0_8], %33 {strides = array<i32>} : memref<1x32x256xf32, #tpu.memory_space<vmem>>, vector<1x32x256xf32>,
    return
  }
  func.func @transform_0(%arg0: i32, %arg1: i32) -> (i32, i32, i32) {
    %c0_i32 = arith.constant 0 : i32
    %c0_i32_0 = arith.constant 0 : i32
    return %arg0, %c0_i32, %arg1 : i32, i32, i32
  }
  func.func @transform_1(%arg0: i32, %arg1: i32) -> (i32, i32) {
    %c0_i32 = arith.constant 0 : i32
    %c0_i32_0 = arith.constant 0 : i32
    %c0_i32_1 = arith.constant 0 : i32
    return %c0_i32, %c0_i32_0 : i32, i32
  }
  func.func @transform_2(%arg0: i32, %arg1: i32) -> (i32, i32) {
    %c0_i32 = arith.constant 0 : i32
    %c0_i32_0 = arith.constant 0 : i32
    %c0_i32_1 = arith.constant 0 : i32
    return %c0_i32, %c0_i32_0 : i32, i32
  }
  func.func @transform_3(%arg0: i32, %arg1: i32) -> (i32, i32, i32) {
    %c0_i32 = arith.constant 0 : i32
    %c0_i32_0 = arith.constant 0 : i32
    return %arg0, %c0_i32, %arg1 : i32, i32, i32
  }
}

</mosaic_0001>

<llo_original>
// kernel: recurrent_init_forward.1
$region0: #{recurrent_init_forward.1}
  #allocation0 [shape = 'u32[]', space=smem, size = 0x4, offset = 0x4, fixed_abs, tag = 'smem constant byte address 0x4 - core index']
  #allocation1 [shape = 'u32[144,128]{1,0:T(1,128)}', space=vmem, size = 0x12000, scoped, tag = 'internal scratch']
  %s0 = inlined_call_operand.vmem [shape: f32[2,4,256], index: 0, kind: input, shape index: {}]
  %s1 = inlined_call_operand.vmem [shape: f32[32,4], index: 1, kind: input, shape index: {}]
  %s2 = inlined_call_operand.vmem [shape: f32[32,1], index: 2, kind: input, shape index: {}]
  %s3 = inlined_call_operand.vmem [shape: f32[2,32,256], index: 3, kind: output, shape index: {}]
  %s4 = sld [smem:[#allocation0]]
  $region45: #{recurrent_init_forward.1} parent=0
    _
  %s6 = ssub.s32 1, %s4
  %s7 = scalar_select 0, %s6, %s4
  loop: start=0, step=1, limit=4
  $region2: #{recurrent_init_forward.1} parent=0 // loop_pre_header
    _
  $region3: #{recurrent_init_forward.1} parent=0 // loop_header
    %s9 = sphi 0, %s13
    %p10 = scmp.ge.s32.totalorder %s9, 4
    %s16 = sphi 0, %s28
    %s17 = sphi 0, %s24
    %s18 = sphi 0, %s16
    %s19 = sphi 0, %s17
    %s20 = sphi 0, %s18
    %s21 = sphi 0, %s19
    %s33 = sphi 0, %s35
    %s36 = sphi 0, %s33
    %s37 = sphi 0, %s36
    %s53 = sphi 0, %s37
    %s57 = sphi 0, %s57
    %s59 = sphi 0, %s57
    %s60 = sphi 0, %s59
    %s74 = sphi 0, %s60
    %s78 = sphi 0, %s78
    %s80 = sphi 0, %s78
    %s81 = sphi 0, %s80
    %s95 = sphi 0, %s81
    %s103 = sphi 0, %s105
    %s106 = sphi 0, %s103
    %s107 = sphi 0, %s106
    %s123 = sphi 0, %s107
  $region4: #{recurrent_init_forward.1} parent=0 // loop_header_branch
    %12 = sbr.rel (%p10) target = $region8
  $region5: #{recurrent_init_forward.1} parent=0 // loop_body
    %s14 = ssub.s32 %s9, 1
    %s15 = ssub.s32 %s9, 2
    %s22 = sadd.s32 1, %s17
    %p23 = scmp.ge.s32.totalorder %s22, 1
    %s24 = scalar_select %p23, 0, %s22
    %s25 = sadd.s32 1, %s16
    %s26 = scalar_select %p23, %s25, %s16
    %p27 = scmp.ge.s32.totalorder %s26, 2
    %s28 = scalar_select %p27, 0, %s26
    %s29 = ssub.s32 %s16, %s28
    %s30 = ssub.s32 %s17, %s24
    %s31 = sor.u32 %s29, %s30
    %p32 = scmp.eq.s32.totalorder %s31, 0
    %s34 = sadd.s32 %s33, 1
    %s35 = scalar_select %p32, %s33, %s34
    %p38 = pneg %p32
    %p39 = scmp.eq.s32.totalorder %s9, 1
    %p40 = por %p38, %p39
    %p41 = scmp.ne.s32.totalorder %s33, %s36
    %p42 = scmp.eq.s32.totalorder %s9, 0
    %p43 = por %p41, %p42
    %p44 = scmp.ne.s32.totalorder %s33, %s36
    %p45 = scmp.eq.s32.totalorder %s14, 1
    %p46 = por %p44, %p45
    %p47 = scmp.ne.s32.totalorder %s36, %s37
    %p48 = scmp.eq.s32.totalorder %s14, 0
    %p49 = por %p47, %p48
    %p50 = scmp.ne.s32.totalorder %s36, %s37
    %p51 = scmp.eq.s32.totalorder %s15, 1
    %p52 = por %p50, %p51
    %p54 = scmp.ne.s32.totalorder %s37, %s53
    %p55 = scmp.eq.s32.totalorder %s15, 0
    %p56 = por %p54, %p55
    %s58 = sadd.s32 %s57, 1
    %p61 = scmp.eq.s32.totalorder %s9, 1
    %p62 = scmp.ne.s32.totalorder %s57, %s59
    %p63 = scmp.eq.s32.totalorder %s9, 0
    %p64 = por %p62, %p63
    %p65 = scmp.ne.s32.totalorder %s57, %s59
    %p66 = scmp.eq.s32.totalorder %s14, 1
    %p67 = por %p65, %p66
    %p68 = scmp.ne.s32.totalorder %s59, %s60
    %p69 = scmp.eq.s32.totalorder %s14, 0
    %p70 = por %p68, %p69
    %p71 = scmp.ne.s32.totalorder %s59, %s60
    %p72 = scmp.eq.s32.totalorder %s15, 1
    %p73 = por %p71, %p72
    %p75 = scmp.ne.s32.totalorder %s60, %s74
    %p76 = scmp.eq.s32.totalorder %s15, 0
    %p77 = por %p75, %p76
    %s79 = sadd.s32 %s78, 1
    %p82 = scmp.eq.s32.totalorder %s9, 1
    %p83 = scmp.ne.s32.totalorder %s78, %s80
    %p84 = scmp.eq.s32.totalorder %s9, 0
    %p85 = por %p83, %p84
    %p86 = scmp.ne.s32.totalorder %s78, %s80
    %p87 = scmp.eq.s32.totalorder %s14, 1
    %p88 = por %p86, %p87
    %p89 = scmp.ne.s32.totalorder %s80, %s81
    %p90 = scmp.eq.s32.totalorder %s14, 0
    %p91 = por %p89, %p90
    %p92 = scmp.ne.s32.totalorder %s80, %s81
    %p93 = scmp.eq.s32.totalorder %s15, 1
    %p94 = por %p92, %p93
    %p96 = scmp.ne.s32.totalorder %s81, %s95
    %p97 = scmp.eq.s32.totalorder %s15, 0
    %p98 = por %p96, %p97
    %s99 = ssub.s32 %s16, %s28
    %s100 = ssub.s32 %s17, %s24
    %s101 = sor.u32 %s99, %s100
    %p102 = scmp.eq.s32.totalorder %s101, 0
    %s104 = sadd.s32 %s103, 1
    %s105 = scalar_select %p102, %s103, %s104
    %p108 = pneg %p102
    %p109 = scmp.eq.s32.totalorder %s9, 1
    %p110 = por %p108, %p109
    %p111 = scmp.ne.s32.totalorder %s103, %s106
    %p112 = scmp.eq.s32.totalorder %s9, 0
    %p113 = por %p111, %p112
    %p114 = scmp.ne.s32.totalorder %s103, %s106
    %p115 = scmp.eq.s32.totalorder %s14, 1
    %p116 = por %p114, %p115
    %p117 = scmp.ne.s32.totalorder %s106, %s107
    %p118 = scmp.eq.s32.totalorder %s14, 0
    %p119 = por %p117, %p118
    %p120 = scmp.ne.s32.totalorder %s106, %s107
    %p121 = scmp.eq.s32.totalorder %s15, 1
    %p122 = por %p120, %p121
    %p124 = scmp.ne.s32.totalorder %s107, %s123
    %p125 = scmp.eq.s32.totalorder %s15, 0
    %p126 = por %p124, %p125
    %p127 = scmp.le.s32.totalorder 1, %s9
    %p128 = scmp.lt.s32.totalorder %s9, 3
    %p129 = pnand %p127, %p128
    %p130 = pneg %p129
    // Predicated region
    $region9: #{recurrent_init_forward.1} parent=5 // pred_check
      _
    $region10: #{recurrent_init_forward.1} parent=5 // pred_check_branch
      %132 = sbr.rel (%p129) target = $region12
    $region11: #{recurrent_init_forward.1} parent=5 // pred_region
      %s133 = ssub.s32 %s9, 1
      // Predicated region
      $region13: #{recurrent_init_forward.1} parent=11 // pred_check
        %p134 = pneg %p70
      $region14: #{recurrent_init_forward.1} parent=11 // pred_check_branch
        %136 = sbr.rel (%p134) target = $region16
      $region15: #{recurrent_init_forward.1} parent=11 // pred_region
        _
      $region16: #{recurrent_init_forward.1} parent=11 // pred_fallthru
        _
      // Predicated region
      $region17: #{recurrent_init_forward.1} parent=11 // pred_check
        %p137 = pneg %p91
      $region18: #{recurrent_init_forward.1} parent=11 // pred_check_branch
        %139 = sbr.rel (%p137) target = $region20
      $region19: #{recurrent_init_forward.1} parent=11 // pred_region
        _
      $region20: #{recurrent_init_forward.1} parent=11 // pred_fallthru
        _
    $region12: #{recurrent_init_forward.1} parent=5 // pred_fallthru
      _
    %p140 = scmp.lt.s32.totalorder %s9, 2
    // Predicated region
    $region21: #{recurrent_init_forward.1} parent=5 // pred_check
      %p141 = pneg %p140
    $region22: #{recurrent_init_forward.1} parent=5 // pred_check_branch
      %143 = sbr.rel (%p141) target = $region24
    $region23: #{recurrent_init_forward.1} parent=5 // pred_region
      // Predicated region
      $region25: #{recurrent_init_forward.1} parent=23 // pred_check
        %p144 = pneg %p43
      $region26: #{recurrent_init_forward.1} parent=23 // pred_check_branch
        %146 = sbr.rel (%p144) target = $region28
      $region27: #{recurrent_init_forward.1} parent=23 // pred_region
        %s147 = smul.u32 2, %s17
        %p148 = scmp.lt.s32.totalorder %s16, 1
        %s149 = scalar_select %p148, %s16, 1
        %p150 = scmp.lt.s32.totalorder %s147, 1
        %s151 = scalar_select %p150, %s147, 1
        %s152 = smul.addr %s149, 2
        %s153 = sadd.s32 %s151, %s152
        %s154 = smul.addr %s153, 4
        %s155 = scalar_lea.vmem %s0, %s154
        %s156 = smul.u32 2, %s17
      $region28: #{recurrent_init_forward.1} parent=23 // pred_fallthru
        _
    $region24: #{recurrent_init_forward.1} parent=5 // pred_fallthru
      _
    %p157 = scmp.le.s32.totalorder 1, %s9
    %p158 = scmp.lt.s32.totalorder %s9, 3
    %p159 = pnand %p157, %p158
    %p160 = pneg %p159
    // Predicated region
    $region29: #{recurrent_init_forward.1} parent=5 // pred_check
      _
    $region30: #{recurrent_init_forward.1} parent=5 // pred_check_branch
      %162 = sbr.rel (%p159) target = $region32
    $region31: #{recurrent_init_forward.1} parent=5 // pred_region
      %s163 = ssub.s32 %s9, 1
      %s164 = smul.u32 2, %s19
      %p165 = scmp.lt.s32.totalorder %s18, 1
      %s166 = scalar_select %p165, %s18, 1
      %p167 = scmp.lt.s32.totalorder %s164, 1
      %s168 = scalar_select %p167, %s164, 1
      %s169 = smul.addr %s166, 2
      %s170 = sadd.s32 %s168, %s169
      %s171 = smul.addr %s170, 4
      %s172 = scalar_lea.vmem %s0, %s171
      %p173 = pneg %p49
      %p174 = pneg %p46
      %p175 = pneg %p70
      %p176 = pneg %p67
      %p177 = pneg %p91
      %p178 = pneg %p88
      %p179 = pneg %p119
      %p180 = pneg %p116
      %s181 = smul.u32 2, %s19
      %p182 = scmp.lt.s32.totalorder %s18, 1
      %s183 = scalar_select %p182, %s18, 1
      %p184 = scmp.lt.s32.totalorder %s181, 1
      %s185 = scalar_select %p184, %s181, 1
      %s186 = smul.addr %s183, 8
      %s187 = sadd.s32 %s185, %s186
      %s188 = smul.addr %s187, 8
      %s189 = scalar_lea.vmem %s3, %s188
      %s190 = smul.u32 2, %s19
      %p191 = scmp.lt.s32.totalorder %s18, 1
      %s192 = scalar_select %p191, %s18, 1
      %p193 = scmp.lt.s32.totalorder %s190, 1
      %s194 = scalar_select %p193, %s190, 1
      %s195 = smul.addr %s192, 2
      %s196 = sadd.s32 %s194, %s195
      %s197 = smul.addr %s196, 4
      %s198 = scalar_lea.vmem %s0, %s197
      %s199 = smul.u32 2, %s19
      %s200 = smul.u32 2, %s19
      %p201 = scmp.lt.s32.totalorder %s18, 1
      %s202 = scalar_select %p201, %s18, 1
      %p203 = scmp.lt.s32.totalorder %s200, 1
      %s204 = scalar_select %p203, %s200, 1
      %s205 = smul.addr %s202, 8
      %s206 = sadd.s32 %s204, %s205
      %s207 = smul.addr %s206, 8
      %s208 = scalar_lea.vmem %s3, %s207
      %s209 = smul.u32 2, %s19
      %v210 = vld [vmem:[%s198] sm:$0xff]
      %v211 = vld [vmem:[%s1] sm:$0xff]
      %v212 = vld [vmem:[%s1 + $0x8] sm:$0xff]
      %v213 = vld [vmem:[%s1 + $0x10] sm:$0xff]
      %v214 = vld [vmem:[%s1 + $0x18] sm:$0xff]
      %v215 = vld [vmem:[%s2] sm:$0xff]
      %v216 = vld [vmem:[%s2 + $0x8] sm:$0xff]
      %v217 = vld [vmem:[%s2 + $0x10] sm:$0xff]
      %v218 = vld [vmem:[%s2 + $0x18] sm:$0xff]
      %220 = vset.pattern.permute.xlu0 0
      %221 = vperm.xlu0 %220, %v211
      %v222 = vpop.permute.xlu0 %221
      %225 = vset.pattern.permute.xlu0 0
      %226 = vperm.xlu0 %225, %v212
      %v227 = vpop.permute.xlu0 %226
      %230 = vset.pattern.permute.xlu0 0
      %231 = vperm.xlu0 %230, %v213
      %v232 = vpop.permute.xlu0 %231
      %235 = vset.pattern.permute.xlu0 0
      %236 = vperm.xlu0 %235, %v214
      %v237 = vpop.permute.xlu0 %236
      %v240 = vlaneseq
      %v241 = vshrl.u32 %v240, 7
      %v242 = vsub.s32 0, %v241
      %v243 = vrot.slane %v210, %v242
      %v244 = vlaneseq
      %v245 = vshrl.u32 %v244, 7
      %v246 = vsub.s32 4, %v245
      %v247 = vrot.slane %v210, %v246
      %v250 = vlaneseq
      %v251 = vshrl.u32 %v250, 7
      %v252 = vsub.s32 0, %v251
      %v253 = vrot.slane %v243, %v252
      %v254 = vlaneseq
      %v255 = vshrl.u32 %v254, 7
      %v256 = vsub.s32 0, %v255
      %v257 = vrot.slane %v247, %v256
      %v258 = vmul.f32 %v222, %v253
      %v259 = vmul.f32 %v222, %v257
      %v260 = vmul.f32 %v227, %v253
      %v261 = vmul.f32 %v227, %v257
      %v262 = vmul.f32 %v232, %v253
      %v263 = vmul.f32 %v232, %v257
      %v264 = vmul.f32 %v237, %v253
      %v265 = vmul.f32 %v237, %v257
      %266 = vset.pattern.permute.xlu0 1
      %267 = vperm.xlu0 %266, %v211
      %v268 = vpop.permute.xlu0 %267
      %270 = vset.pattern.permute.xlu0 1
      %271 = vperm.xlu0 %270, %v212
      %v272 = vpop.permute.xlu0 %271
      %274 = vset.pattern.permute.xlu0 1
      %275 = vperm.xlu0 %274, %v213
      %v276 = vpop.permute.xlu0 %275
      %278 = vset.pattern.permute.xlu0 1
      %279 = vperm.xlu0 %278, %v214
      %v280 = vpop.permute.xlu0 %279
      %v282 = vlaneseq
      %v283 = vshrl.u32 %v282, 7
      %v284 = vsub.s32 1, %v283
      %v285 = vrot.slane %v210, %v284
      %v286 = vlaneseq
      %v287 = vshrl.u32 %v286, 7
      %v288 = vsub.s32 5, %v287
      %v289 = vrot.slane %v210, %v288
      %v292 = vlaneseq
      %v293 = vshrl.u32 %v292, 7
      %v294 = vsub.s32 1, %v293
      %v295 = vrot.slane %v285, %v294
      %v296 = vlaneseq
      %v297 = vshrl.u32 %v296, 7
      %v298 = vsub.s32 1, %v297
      %v299 = vrot.slane %v289, %v298
      %v300 = vmul.f32 %v268, %v295
      %v301 = vmul.f32 %v268, %v299
      %v302 = vmul.f32 %v272, %v295
      %v303 = vmul.f32 %v272, %v299
      %v304 = vmul.f32 %v276, %v295
      %v305 = vmul.f32 %v276, %v299
      %v306 = vmul.f32 %v280, %v295
      %v307 = vmul.f32 %v280, %v299
      %v308 = vadd.f32 %v258, %v300
      %v309 = vadd.f32 %v259, %v301
      %v310 = vadd.f32 %v260, %v302
      %v311 = vadd.f32 %v261, %v303
      %v312 = vadd.f32 %v262, %v304
      %v313 = vadd.f32 %v263, %v305
      %v314 = vadd.f32 %v264, %v306
      %v315 = vadd.f32 %v265, %v307
      %316 = vset.pattern.permute.xlu0 2
      %317 = vperm.xlu0 %316, %v211
      %v318 = vpop.permute.xlu0 %317
      %320 = vset.pattern.permute.xlu0 2
      %321 = vperm.xlu0 %320, %v212
      %v322 = vpop.permute.xlu0 %321
      %324 = vset.pattern.permute.xlu0 2
      %325 = vperm.xlu0 %324, %v213
      %v326 = vpop.permute.xlu0 %325
      %328 = vset.pattern.permute.xlu0 2
      %329 = vperm.xlu0 %328, %v214
      %v330 = vpop.permute.xlu0 %329
      %v332 = vlaneseq
      %v333 = vshrl.u32 %v332, 7
      %v334 = vsub.s32 2, %v333
      %v335 = vrot.slane %v210, %v334
      %v336 = vlaneseq
      %v337 = vshrl.u32 %v336, 7
      %v338 = vsub.s32 6, %v337
      %v339 = vrot.slane %v210, %v338
      %v342 = vlaneseq
      %v343 = vshrl.u32 %v342, 7
      %v344 = vsub.s32 2, %v343
      %v345 = vrot.slane %v335, %v344
      %v346 = vlaneseq
      %v347 = vshrl.u32 %v346, 7
      %v348 = vsub.s32 2, %v347
      %v349 = vrot.slane %v339, %v348
      %v350 = vmul.f32 %v318, %v345
      %v351 = vmul.f32 %v318, %v349
      %v352 = vmul.f32 %v322, %v345
      %v353 = vmul.f32 %v322, %v349
      %v354 = vmul.f32 %v326, %v345
      %v355 = vmul.f32 %v326, %v349
      %v356 = vmul.f32 %v330, %v345
      %v357 = vmul.f32 %v330, %v349
      %v358 = vadd.f32 %v308, %v350
      %v359 = vadd.f32 %v309, %v351
      %v360 = vadd.f32 %v310, %v352
      %v361 = vadd.f32 %v311, %v353
      %v362 = vadd.f32 %v312, %v354
      %v363 = vadd.f32 %v313, %v355
      %v364 = vadd.f32 %v314, %v356
      %v365 = vadd.f32 %v315, %v357
      %366 = vset.pattern.permute.xlu0 3
      %367 = vperm.xlu0 %366, %v211
      %v368 = vpop.permute.xlu0 %367
      %370 = vset.pattern.permute.xlu0 3
      %371 = vperm.xlu0 %370, %v212
      %v372 = vpop.permute.xlu0 %371
      %374 = vset.pattern.permute.xlu0 3
      %375 = vperm.xlu0 %374, %v213
      %v376 = vpop.permute.xlu0 %375
      %378 = vset.pattern.permute.xlu0 3
      %379 = vperm.xlu0 %378, %v214
      %v380 = vpop.permute.xlu0 %379
      %v382 = vlaneseq
      %v383 = vshrl.u32 %v382, 7
      %v384 = vsub.s32 3, %v383
      %v385 = vrot.slane %v210, %v384
      %v386 = vlaneseq
      %v387 = vshrl.u32 %v386, 7
      %v388 = vsub.s32 7, %v387
      %v389 = vrot.slane %v210, %v388
      %v392 = vlaneseq
      %v393 = vshrl.u32 %v392, 7
      %v394 = vsub.s32 3, %v393
      %v395 = vrot.slane %v385, %v394
      %v396 = vlaneseq
      %v397 = vshrl.u32 %v396, 7
      %v398 = vsub.s32 3, %v397
      %v399 = vrot.slane %v389, %v398
      %v400 = vmul.f32 %v368, %v395
      %v401 = vmul.f32 %v368, %v399
      %v402 = vmul.f32 %v372, %v395
      %v403 = vmul.f32 %v372, %v399
      %v404 = vmul.f32 %v376, %v395
      %v405 = vmul.f32 %v376, %v399
      %v406 = vmul.f32 %v380, %v395
      %v407 = vmul.f32 %v380, %v399
      %v408 = vadd.f32 %v358, %v400
      %v409 = vadd.f32 %v359, %v401
      %v410 = vadd.f32 %v360, %v402
      %v411 = vadd.f32 %v361, %v403
      %v412 = vadd.f32 %v362, %v404
      %v413 = vadd.f32 %v363, %v405
      %v414 = vadd.f32 %v364, %v406
      %v415 = vadd.f32 %v365, %v407
      %417 = vset.pattern.permute.xlu0 0
      %418 = vperm.xlu0 %417, %v215
      %v419 = vpop.permute.xlu0 %418
      %422 = vset.pattern.permute.xlu0 0
      %423 = vperm.xlu0 %422, %v216
      %v424 = vpop.permute.xlu0 %423
      %427 = vset.pattern.permute.xlu0 0
      %428 = vperm.xlu0 %427, %v217
      %v429 = vpop.permute.xlu0 %428
      %432 = vset.pattern.permute.xlu0 0
      %433 = vperm.xlu0 %432, %v218
      %v434 = vpop.permute.xlu0 %433
      %v436 = vadd.f32 %v408, %v419
      %v437 = vadd.f32 %v409, %v419
      %v438 = vadd.f32 %v410, %v424
      %v439 = vadd.f32 %v411, %v424
      %v440 = vadd.f32 %v412, %v429
      %v441 = vadd.f32 %v413, %v429
      %v442 = vadd.f32 %v414, %v434
      %v443 = vadd.f32 %v415, %v434
      %v444 = vmax.f32 %v436, 0.0
      %v445 = vmax.f32 %v437, 0.0
      %v446 = vmax.f32 %v438, 0.0
      %v447 = vmax.f32 %v439, 0.0
      %v448 = vmax.f32 %v440, 0.0
      %v449 = vmax.f32 %v441, 0.0
      %v450 = vmax.f32 %v442, 0.0
      %v451 = vmax.f32 %v443, 0.0
      %452 = vst [vmem:[%s208] sm:$0xff] %v444
      %453 = vst [vmem:[%s208 + $0x8] sm:$0xff] %v445
      %454 = vst [vmem:[%s208 + $0x10] sm:$0xff] %v446
      %455 = vst [vmem:[%s208 + $0x18] sm:$0xff] %v447
      %456 = vst [vmem:[%s208 + $0x20] sm:$0xff] %v448
      %457 = vst [vmem:[%s208 + $0x28] sm:$0xff] %v449
      %458 = vst [vmem:[%s208 + $0x30] sm:$0xff] %v450
      %459 = vst [vmem:[%s208 + $0x38] sm:$0xff] %v451
      %s460 = smul.u32 2, %s19
      %p461 = scmp.lt.s32.totalorder %s18, 1
      %s462 = scalar_select %p461, %s18, 1
      %p463 = scmp.lt.s32.totalorder %s460, 1
      %s464 = scalar_select %p463, %s460, 1
      %s465 = smul.addr %s462, 8
      %s466 = sadd.s32 %s464, %s465
      %s467 = smul.addr %s466, 8
      %s468 = scalar_lea.vmem %s3, %s467
      // Predicated region
      $region33: #{recurrent_init_forward.1} parent=31 // pred_check
        %p469 = pneg %p116
      $region34: #{recurrent_init_forward.1} parent=31 // pred_check_branch
        %471 = sbr.rel (%p469) target = $region36
      $region35: #{recurrent_init_forward.1} parent=31 // pred_region
        %s472 = smul.u32 2, %s19
      $region36: #{recurrent_init_forward.1} parent=31 // pred_fallthru
        _
    $region32: #{recurrent_init_forward.1} parent=5 // pred_fallthru
      _
    %p473 = scmp.le.s32.totalorder 2, %s9
    // Predicated region
    $region37: #{recurrent_init_forward.1} parent=5 // pred_check
      %p474 = pneg %p473
    $region38: #{recurrent_init_forward.1} parent=5 // pred_check_branch
      %476 = sbr.rel (%p474) target = $region40
    $region39: #{recurrent_init_forward.1} parent=5 // pred_region
      %s477 = ssub.s32 %s9, 2
      // Predicated region
      $region41: #{recurrent_init_forward.1} parent=39 // pred_check
        %p478 = pneg %p122
      $region42: #{recurrent_init_forward.1} parent=39 // pred_check_branch
        %480 = sbr.rel (%p478) target = $region44
      $region43: #{recurrent_init_forward.1} parent=39 // pred_region
        %s481 = smul.u32 2, %s21
        %p482 = scmp.lt.s32.totalorder %s20, 1
        %s483 = scalar_select %p482, %s20, 1
        %p484 = scmp.lt.s32.totalorder %s481, 1
        %s485 = scalar_select %p484, %s481, 1
        %s486 = smul.addr %s483, 8
        %s487 = sadd.s32 %s485, %s486
        %s488 = smul.addr %s487, 8
        %s489 = scalar_lea.vmem %s3, %s488
      $region44: #{recurrent_init_forward.1} parent=39 // pred_fallthru
        _
    $region40: #{recurrent_init_forward.1} parent=5 // pred_fallthru
      _
  $region6: #{recurrent_init_forward.1} parent=0 // loop_footer
    %s13 = sadd.s32 1, %s9
  $region7: #{recurrent_init_forward.1} parent=0 // loop_footer_branch
    %8 = sbr.rel target = $region3
  $region8: #{recurrent_init_forward.1} parent=0 // loop_exit
    _

</llo_original>
